<compile_context>
chip_gen: v6e
topology: v6e:2x2x1
jax: 0.10.0
libtpu: 0.0.40
codegen_flags: <defaults>
</compile_context>

<pallas_src>
import functools
import math

import numpy as np
import jax
import jax.numpy as jnp
from jax.experimental import pallas as pl
from jax.experimental.pallas import tpu as pltpu

HIDDEN = 200          # self.hidden_channels
DEPTH = 2             # constructor arg (default 3); small value for the demo
NUM_HEADS_GAT = 5
NUM_HEADS_MHA = 5

MM_DTYPE = jnp.bfloat16                 # matmul operand dtype (f32 accumulate)


def _round_up(x, m):
    return ((x + m - 1) // m) * m


def _vmem_limit_bytes():
    # Raise the scoped-VMEM cap on 128 MiB chips (v5e/v6e), stay conservative
    # on v7x (64 MiB physical per TensorCore). Safe fallback = 32 MiB.
    try:
        info = pltpu.get_tpu_info()
        cap = getattr(info, "vmem_capacity_bytes", None)
        if cap is None:
            return 32 * 1024 * 1024
        return max(32 * 1024 * 1024, min(96 * 1024 * 1024, int(cap) // 2))
    except Exception:
        return 32 * 1024 * 1024


VMEM_LIMIT = _vmem_limit_bytes()


def _cparams(semantics):
    return pltpu.CompilerParams(dimension_semantics=semantics,
                                vmem_limit_bytes=VMEM_LIMIT)


def _pick_bt(B, cap=8):
    for bt in range(min(B, cap), 0, -1):
        if B % bt == 0:
            return bt
    return 1


# ----------------------------------------------------------------------------
# Pallas kernels
# ----------------------------------------------------------------------------
def _linear_kernel(x_ref, w_ref, b_ref, o_ref, *, act):
    x = x_ref[...].astype(MM_DTYPE)
    y = jnp.dot(x, w_ref[...], preferred_element_type=jnp.float32) + b_ref[...]
    if act == "relu":
        y = jnp.maximum(y, 0.0)
    o_ref[...] = y


@functools.partial(jax.jit, static_argnames=("act",))
def linear(x, w, b, act="none"):
    """y = x @ w + b (optional ReLU). w is pre-cast bf16, accumulate in f32."""
    M, K = x.shape
    N = w.shape[1]
    w = w.astype(MM_DTYPE)
    xp = x.astype(jnp.float32)
    if M <= 512:
        bm, Mp = M, M                      # single block == full array: no pad
    else:
        bm = 512
        Mp = _round_up(M, bm)
        if Mp != M:
            xp = jnp.pad(xp, ((0, Mp - M), (0, 0)))
    out = pl.pallas_call(
        functools.partial(_linear_kernel, act=act),
        out_shape=jax.ShapeDtypeStruct((Mp, N), jnp.float32),
        grid=(Mp // bm,),
        in_specs=[
            pl.BlockSpec((bm, K), lambda i: (i, 0)),
            pl.BlockSpec((K, N), lambda i: (0, 0)),
            pl.BlockSpec((1, N), lambda i: (0, 0)),
        ],
        out_specs=pl.BlockSpec((bm, N), lambda i: (i, 0)),
        compiler_params=_cparams(("parallel",)),
    )(xp, w, b.reshape(1, N))
    return out if Mp == M else out[:M]


def _mlp_kernel(x_ref, w1_ref, b1_ref, w2_ref, b2_ref, g_ref, be_ref, o_ref, *, eps):
    # Fused: (x @ w1 + b1) -> relu -> (@ w2 + b2) -> layernorm, no HBM round trips.
    x = x_ref[...].astype(MM_DTYPE)
    h = jnp.dot(x, w1_ref[...], preferred_element_type=jnp.float32) + b1_ref[...]
    h = jnp.maximum(h, 0.0)
    y = jnp.dot(h.astype(MM_DTYPE), w2_ref[...],
                preferred_element_type=jnp.float32) + b2_ref[...]
    mu = jnp.mean(y, axis=-1, keepdims=True)
    var = jnp.mean((y - mu) ** 2, axis=-1, keepdims=True)
    o_ref[...] = (y - mu) * jax.lax.rsqrt(var + eps) * g_ref[...] + be_ref[...]


@jax.jit
def mlp_forward(p, x):
    # TODO(synk): MLP helper not provided; Linear->ReLU->Linear->LayerNorm assumed.
    M, K = x.shape
    H1 = p["w1"].shape[1]
    H2 = p["w2"].shape[1]
    xp = x.astype(jnp.float32)
    if M <= 512:
        bm, Mp = M, M
    else:
        bm = 512
        Mp = _round_up(M, bm)
        if Mp != M:
            xp = jnp.pad(xp, ((0, Mp - M), (0, 0)))
    out = pl.pallas_call(
        functools.partial(_mlp_kernel, eps=1e-5),
        out_shape=jax.ShapeDtypeStruct((Mp, H2), jnp.float32),
        grid=(Mp // bm,),
        in_specs=[
            pl.BlockSpec((bm, K), lambda i: (i, 0)),
            pl.BlockSpec((K, H1), lambda i: (0, 0)),
            pl.BlockSpec((1, H1), lambda i: (0, 0)),
            pl.BlockSpec((H1, H2), lambda i: (0, 0)),
            pl.BlockSpec((1, H2), lambda i: (0, 0)),
            pl.BlockSpec((1, H2), lambda i: (0, 0)),
            pl.BlockSpec((1, H2), lambda i: (0, 0)),
        ],
        out_specs=pl.BlockSpec((bm, H2), lambda i: (i, 0)),
        compiler_params=_cparams(("parallel",)),
    )(xp, p["w1"].astype(MM_DTYPE), p["b1"].reshape(1, -1),
      p["w2"].astype(MM_DTYPE), p["b2"].reshape(1, -1),
      p["g"].reshape(1, -1), p["be"].reshape(1, -1))
    return out if Mp == M else out[:M]


def _cnn_stack_kernel(x_ref, w1_ref, b1_ref, w2_ref, b2_ref, w3_ref, b3_ref,
                      o_ref, *, ks, bt):
    # Fused 3x (valid conv1d + ReLU), channels-last.  Each conv is an
    # accumulation of K shifted (L,Cin)@(Cin,Cout) matmuls (no im2col concat),
    # with intermediate channel widths zero-padded to 128 (lane-dense stores).
    def conv(x, w_ref, b_ref, K):
        Lout = x.shape[0] - K + 1
        y = None
        for k in range(K):
            t = jnp.dot(x[k:k + Lout, :].astype(MM_DTYPE), w_ref[k],
                        preferred_element_type=jnp.float32)
            y = t if y is None else y + t
        return jnp.maximum(y + b_ref[...], 0.0)

    for b in range(bt):
        x = x_ref[b]                          # (L, Cin), f32
        x = conv(x, w1_ref, b1_ref, ks[0])
        x = conv(x, w2_ref, b2_ref, ks[1])
        x = conv(x, w3_ref, b3_ref, ks[2])
        o_ref[b] = x


@functools.partial(jax.jit, static_argnames=("ks", "bt"))
def _cnn_stack_call(x, ws, bs, ks, bt):
    B, L, Cin = x.shape
    louts = []
    l = L
    for k in ks:
        l = l - k + 1
        louts.append(l)
    cout = ws[-1].shape[-1]

    in_specs = [pl.BlockSpec((bt, L, Cin), lambda i: (i, 0, 0))]
    args = [x.astype(jnp.float32)]
    for w, b in zip(ws, bs):
        in_specs.append(pl.BlockSpec(w.shape, lambda i: (0, 0, 0)))
        in_specs.append(pl.BlockSpec((1, b.shape[0]), lambda i: (0, 0)))
        args.append(w.astype(MM_DTYPE))
        args.append(b.reshape(1, -1))

    return pl.pallas_call(
        functools.partial(_cnn_stack_kernel, ks=ks, bt=bt),
        out_shape=jax.ShapeDtypeStruct((B, louts[-1], cout), jnp.float32),
        grid=(B // bt,),
        in_specs=in_specs,
        out_specs=pl.BlockSpec((bt, louts[-1], cout), lambda i: (i, 0, 0)),
        compiler_params=_cparams(("parallel",)),
    )(*args)


def cnn_stack_fused(layers, x):
    assert len(layers) == 3
    ws = tuple(w for (w, b, k) in layers)
    bs = tuple(b for (w, b, k) in layers)
    ks = tuple(int(k) for (w, b, k) in layers)
    return _cnn_stack_call(x, ws, bs, ks, _pick_bt(x.shape[0]))


def _mha_kernel(q_ref, kv_ref, wq_ref, bq_ref, wk_ref, bk_ref, wv_ref, bv_ref,
                wo_ref, bo_ref, o_ref, ctx_ref, *, num_heads, scale, bt):
    # Fused MHA for `bt` batch elements: Q/K/V projections + per-head softmax
    # attention with head contexts written into a VMEM scratch slab, then a
    # single K=E output projection + 0.5/0.5 residual mix.  Dropout (eval) = id.
    E = q_ref.shape[-1]
    Dh = E // num_heads
    wq = wq_ref[...]
    wk = wk_ref[...]
    wv = wv_ref[...]
    wo = wo_ref[...]
    bq = bq_ref[...]
    bk = bk_ref[...]
    bv = bv_ref[...]
    bo = bo_ref[...]

    for b in range(bt):
        qi = q_ref[b]                         # (Lq, E) f32
        kvi = kv_ref[b]                       # (Lk, E) f32
        qn = qi.astype(MM_DTYPE)
        kvn = kvi.astype(MM_DTYPE)
        q = jnp.dot(qn, wq, preferred_element_type=jnp.float32) + bq
        k = jnp.dot(kvn, wk, preferred_element_type=jnp.float32) + bk
        v = jnp.dot(kvn, wv, preferred_element_type=jnp.float32) + bv

        for h in range(num_heads):
            qh = q[:, h * Dh:(h + 1) * Dh].astype(MM_DTYPE)
            kh = k[:, h * Dh:(h + 1) * Dh].astype(MM_DTYPE)
            vh = v[:, h * Dh:(h + 1) * Dh].astype(MM_DTYPE)
            s = jax.lax.dot_general(qh, kh, (((1,), (1,)), ((), ())),
                                    preferred_element_type=jnp.float32) * scale
            m = jnp.max(s, axis=-1, keepdims=True)
            p = jnp.exp(s - m)
            p = p / jnp.sum(p, axis=-1, keepdims=True)          # exact softmax
            oh = jnp.dot(p.astype(MM_DTYPE), vh,
                         preferred_element_type=jnp.float32)    # (Lq, Dh)
            ctx_ref[b, :, h * Dh:(h + 1) * Dh] = oh

        attn = jnp.dot(ctx_ref[b].astype(MM_DTYPE), wo,
                       preferred_element_type=jnp.float32) + bo
        o_ref[b] = 0.5 * qi + 0.5 * attn


@functools.partial(jax.jit, static_argnames=("num_heads", "bt"))
def fused_mha(wq, bq, wk, bk, wv, bv, wo, bo, query, keyval, num_heads, bt):
    B, Lq, E = query.shape
    Lk = keyval.shape[1]
    scale = 1.0 / math.sqrt(E // num_heads)
    return pl.pallas_call(
        functools.partial(_mha_kernel, num_heads=num_heads, scale=scale, bt=bt),
        out_shape=jax.ShapeDtypeStruct((B, Lq, E), jnp.float32),
        grid=(B // bt,),
        in_specs=[
            pl.BlockSpec((bt, Lq, E), lambda i: (i, 0, 0)),
            pl.BlockSpec((bt, Lk, E), lambda i: (i, 0, 0)),
            pl.BlockSpec((E, E), lambda i: (0, 0)),
            pl.BlockSpec((1, E), lambda i: (0, 0)),
            pl.BlockSpec((E, E), lambda i: (0, 0)),
            pl.BlockSpec((1, E), lambda i: (0, 0)),
            pl.BlockSpec((E, E), lambda i: (0, 0)),
            pl.BlockSpec((1, E), lambda i: (0, 0)),
            pl.BlockSpec((E, E), lambda i: (0, 0)),
            pl.BlockSpec((1, E), lambda i: (0, 0)),
        ],
        out_specs=pl.BlockSpec((bt, Lq, E), lambda i: (i, 0, 0)),
        scratch_shapes=[pltpu.VMEM((bt, Lq, E), jnp.float32)],
        compiler_params=_cparams(("parallel",)),
    )(query, keyval,
      wq.astype(MM_DTYPE), bq.reshape(1, E),
      wk.astype(MM_DTYPE), bk.reshape(1, E),
      wv.astype(MM_DTYPE), bv.reshape(1, E),
      wo.astype(MM_DTYPE), bo.reshape(1, E))


def rescal_score(d, p, m):
    # TODO(synk): RESCAL class not provided; standard bilinear RESCAL scoring
    # score[b] = sum_{i,j} d[b,i] M p[b,j]^T assumed.  Too small for a Pallas
    # launch (per review) -> plain JAX (exact sum factorization).
    ds = jnp.sum(d, axis=1)
    ps = jnp.sum(p, axis=1)
    return jnp.einsum('bf,fg,bg->b', ds, m, ps)


# ----------------------------------------------------------------------------
# Parameter initialization (deterministic, synthetic)
# ----------------------------------------------------------------------------
class KeyGen:
    def __init__(self, key):
        self.key = key

    def __call__(self):
        self.key, k = jax.random.split(self.key)
        return k


def dense(kg, shape, scale=0.05):
    return scale * jax.random.normal(kg(), shape, dtype=jnp.float32)


def init_mlp(kg, d_in, d_hid, d_out):
    return {
        "w1": dense(kg, (d_in, d_hid)).astype(MM_DTYPE),
        "b1": jnp.zeros((d_hid,), jnp.float32),
        "w2": dense(kg, (d_hid, d_out)).astype(MM_DTYPE),
        "b2": jnp.zeros((d_out,), jnp.float32),
        "g": jnp.ones((d_out,), jnp.float32),
        "be": jnp.zeros((d_out,), jnp.float32),
    }


def init_gat(kg, in_src, in_dst, out, heads, edge_dim=None):
    HO = heads * out
    w_src = dense(kg, (in_src, HO))
    w_dst = dense(kg, (in_dst, HO))
    p = {
        "w_src": w_src.astype(MM_DTYPE),
        "w_dst": w_dst.astype(MM_DTYPE),
        "att_src": dense(kg, (heads, out)),
        "att_dst": dense(kg, (heads, out)),
        "bias": jnp.zeros((HO,), jnp.float32),
        "zb": jnp.zeros((HO,), jnp.float32),
        "heads": heads, "out": out,
    }
    if in_src == in_dst:
        # Fused src|dst projection for the x_src is x_dst case (one launch).
        p["w_sd"] = jnp.concatenate([w_src, w_dst], axis=1).astype(MM_DTYPE)
        p["zb2"] = jnp.zeros((2 * HO,), jnp.float32)
    if edge_dim is not None:
        p["w_edge"] = dense(kg, (edge_dim, HO)).astype(MM_DTYPE)
        p["att_edge"] = dense(kg, (heads, out))
    return p


def gat_conv(p, x_src, x_dst, edge_index, edge_attr=None):
    # TODO(synk): PyG GATConv semantics assumed (no self loops, LeakyReLU 0.2).
    heads, out = p["heads"], p["out"]
    HO = heads * out
    num_dst = x_dst.shape[0]
    if (x_src is x_dst) and ("w_sd" in p):
        h = linear(x_src, p["w_sd"], p["zb2"])           # (N, 2*HO), one launch
        h_src = h[:, :HO].reshape(-1, heads, out)
        h_dst = h[:, HO:].reshape(-1, heads, out)
    else:
        h_src = linear(x_src, p["w_src"], p["zb"]).reshape(-1, heads, out)
        h_dst = linear(x_dst, p["w_dst"], p["zb"]).reshape(-1, heads, out)
    src, dst = edge_index[0], edge_index[1]
    a_src = jnp.sum(h_src * p["att_src"][None], axis=-1)
    a_dst = jnp.sum(h_dst * p["att_dst"][None], axis=-1)
    alpha = a_src[src] + a_dst[dst]
    if edge_attr is not None:
        h_e = linear(edge_attr, p["w_edge"], p["zb"]).reshape(-1, heads, out)
        alpha = alpha + jnp.sum(h_e * p["att_edge"][None], axis=-1)
    alpha = jnp.where(alpha > 0, alpha, 0.2 * alpha)
    amax = jax.ops.segment_max(alpha, dst, num_segments=num_dst)
    amax = jnp.where(jnp.isfinite(amax), amax, 0.0)
    ea = jnp.exp(alpha - amax[dst])
    den = jax.ops.segment_sum(ea, dst, num_segments=num_dst)
    coef = ea / (den[dst] + 1e-16)
    msg = h_src[src] * coef[:, :, None]
    agg = jax.ops.segment_sum(msg, dst, num_segments=num_dst)
    return agg.reshape(num_dst, HO) + p["bias"]


def graph_layernorm(x, batch, num_graphs, g, b, eps=1e-5):
    # PyG LayerNorm (mode='graph'): normalize over all nodes & channels per graph.
    N, F = x.shape
    cnt = jax.ops.segment_sum(jnp.ones((N,), jnp.float32), batch,
                              num_segments=num_graphs) * F
    mean = jax.ops.segment_sum(jnp.sum(x, axis=-1), batch,
                               num_segments=num_graphs) / cnt
    xc = x - mean[batch][:, None]
    var = jax.ops.segment_sum(jnp.sum(xc * xc, axis=-1), batch,
                              num_segments=num_graphs) / cnt
    return xc * jax.lax.rsqrt(var + eps)[batch][:, None] * g + b


def init_sag(kg, in_ch):
    # Fused (in_ch, 2) scoring projection (self-score | message-score).
    return {"w12": dense(kg, (in_ch, 2)), "b": jnp.zeros((1,), jnp.float32)}


def sag_pool(p, x, edge_index, batch, num_graphs):
    # SAGPooling(min_score=-1): GraphConv score -> per-graph softmax -> keep all.
    # N=1-wide linears done in plain JAX (a Pallas launch would be pure overhead).
    N = x.shape[0]
    parts = x @ p["w12"]                       # (N, 2)
    s_self = parts[:, 0] + p["b"][0]
    s_msg = parts[:, 1]
    src, dst = edge_index[0], edge_index[1]
    agg = jax.ops.segment_sum(s_msg[src], dst, num_segments=N)
    score = s_self + agg
    smax = jax.ops.segment_max(score, batch, num_segments=num_graphs)
    es = jnp.exp(score - smax[batch])
    den = jax.ops.segment_sum(es, batch, num_segments=num_graphs)
    sm = es / (den[batch] + 1e-16)
    return x * sm[:, None], batch


def init_block(kg, in_ch=HIDDEN, out_ch=HIDDEN, heads=NUM_HEADS_GAT):
    hid = out_ch // (heads * 2)                # 20
    return {
        "drug_conv": init_gat(kg, in_ch, in_ch, hid, heads, edge_dim=HIDDEN),
        "prot_conv": init_gat(kg, in_ch, in_ch, hid, heads, edge_dim=HIDDEN),
        "inter_conv": init_gat(kg, in_ch, in_ch, hid, heads, edge_dim=None),
        "drug_norm_g": jnp.ones((out_ch,), jnp.float32),
        "drug_norm_b": jnp.zeros((out_ch,), jnp.float32),
        "prot_norm_g": jnp.ones((out_ch,), jnp.float32),
        "prot_norm_b": jnp.zeros((out_ch,), jnp.float32),
        "drug_pool": init_gat(kg, out_ch, out_ch, out_ch // heads, heads,
                              edge_dim=HIDDEN),
        "prot_pool": init_sag(kg, out_ch),
    }


def mif_block(p, atom_x, atom_edge_index, bond_x, atom_batch,
              aa_x, aa_edge_index, aa_edge_attr, aa_batch,
              m2p_edge_index, num_graphs):
    atom_x_res, aa_x_res = atom_x, aa_x
    m2p_rev = jnp.stack([m2p_edge_index[1], m2p_edge_index[0]])

    atom_intra = gat_conv(p["drug_conv"], atom_x, atom_x, atom_edge_index, bond_x)
    atom_inter = gat_conv(p["inter_conv"], aa_x, atom_x, m2p_rev)
    atom_tmp = jnp.concatenate([atom_intra, atom_inter], axis=-1)
    atom_new = jax.nn.elu(graph_layernorm(atom_tmp, atom_batch, num_graphs,
                                          p["drug_norm_g"], p["drug_norm_b"]))

    aa_intra = gat_conv(p["prot_conv"], aa_x, aa_x, aa_edge_index, aa_edge_attr)
    aa_inter = gat_conv(p["inter_conv"], atom_new, aa_x, m2p_edge_index)
    aa_tmp = jnp.concatenate([aa_intra, aa_inter], axis=-1)
    aa_new = jax.nn.elu(graph_layernorm(aa_tmp, aa_batch, num_graphs,
                                        p["prot_norm_g"], p["prot_norm_b"]))

    atom_pooled = gat_conv(p["drug_pool"], atom_new, atom_new, atom_edge_index, bond_x)
    aa_pooled, aa_batch_p = sag_pool(p["prot_pool"], aa_new, aa_edge_index,
                                     aa_batch, num_graphs)

    atom_out = atom_x_res + jax.nn.elu(atom_pooled)   # dropout(0.1) eval = identity
    aa_out = aa_x_res + jax.nn.elu(aa_pooled)
    drug_global = jax.ops.segment_sum(atom_out, atom_batch, num_segments=num_graphs)
    prot_global = jax.ops.segment_sum(aa_out, aa_batch_p, num_segments=num_graphs)
    return atom_out, aa_out, drug_global, prot_global


def init_cnn_stack(kg, input_dim, conv, kernels):
    # TODO(synk): get_CNNs not provided; MCANet-style Conv1d(conv)->Conv1d(2*conv)
    # ->Conv1d(4*conv), ReLU after each, 'valid' padding, is assumed.
    # Weights stored as (K, Cin, Cout) bf16 slabs; the intermediate channel
    # widths (50, 100) are zero-padded to 128 so activations never leave VMEM
    # with sub-128 lane widths (exactly equivalent numerics).
    chans = [input_dim, conv, conv * 2, conv * 4]
    padded = [chans[0]] + [_round_up(c, 128) for c in chans[1:-1]] + [chans[-1]]
    layers = []
    for i, k in enumerate(kernels):
        cin_l, cout_l = chans[i], chans[i + 1]
        cin_p, cout_p = padded[i], padded[i + 1]
        w = jnp.zeros((k, cin_p, cout_p), jnp.float32)
        w = w.at[:, :cin_l, :cout_l].set(dense(kg, (k, cin_l, cout_l)))
        layers.append((w.astype(MM_DTYPE),
                       jnp.zeros((cout_p,), jnp.float32),
                       int(k)))
    return layers


def init_mha(kg, E):
    return {
        "wq": dense(kg, (E, E)).astype(MM_DTYPE), "bq": jnp.zeros((E,), jnp.float32),
        "wk": dense(kg, (E, E)).astype(MM_DTYPE), "bk": jnp.zeros((E,), jnp.float32),
        "wv": dense(kg, (E, E)).astype(MM_DTYPE), "bv": jnp.zeros((E,), jnp.float32),
        "wo": dense(kg, (E, E)).astype(MM_DTYPE), "bo": jnp.zeros((E,), jnp.float32),
    }


def init_block_1d(kg, input_dim=HIDDEN, conv=50,
                  drug_kernel=(4, 6, 8), prot_kernel=(4, 8, 12)):
    return {
        "drug_cnn": init_cnn_stack(kg, input_dim, conv, drug_kernel),
        "prot_cnn": init_cnn_stack(kg, input_dim, conv, prot_kernel),
        "mha": init_mha(kg, conv * 4),
    }


def mif_block_1d(p, drugembed, proteinembed):
    # Channels-last throughout: no host-side transposes around the CNNs / MHA.
    dC = cnn_stack_fused(p["drug_cnn"], drugembed)       # (B, Ld', 200)
    pC = cnn_stack_fused(p["prot_cnn"], proteinembed)    # (B, Lp', 200)
    m = p["mha"]
    bt = _pick_bt(dC.shape[0])
    # Both attentions use the pre-mix dC/pC; the 0.5/0.5 mix is fused in-kernel.
    # TODO(synk): the two calls share weights; merging into one grid=(2B,) call
    # needs length padding/masking (Ld' != Lp'), left as-is.
    dC_new = fused_mha(m["wq"], m["bq"], m["wk"], m["bk"], m["wv"], m["bv"],
                       m["wo"], m["bo"], dC, pC, NUM_HEADS_MHA, bt)
    pC_new = fused_mha(m["wq"], m["bq"], m["wk"], m["bk"], m["wv"], m["bv"],
                       m["wo"], m["bo"], pC, dC, NUM_HEADS_MHA, bt)
    return dC_new, pC_new, jnp.max(dC_new, axis=1), jnp.max(pC_new, axis=1)


def rbf(D, D_max=1.0, D_count=HIDDEN):
    mu = jnp.linspace(0.0, D_max, D_count)
    sigma = D_max / D_count
    return jnp.exp(-(((D[:, None] - mu[None, :]) / sigma) ** 2))


def init_params(seed=0, depth=DEPTH):
    kg = KeyGen(jax.random.PRNGKey(seed + 1))
    drug_seq = dense(kg, (65, HIDDEN), 0.05).at[0].set(0.0)   # padding_idx=0
    prot_seq = dense(kg, (26, HIDDEN), 0.05).at[0].set(0.0)   # padding_idx=0
    return {
        "atom_type_emb": dense(kg, (20, HIDDEN), 0.05),
        "atom_feat_mlp": init_mlp(kg, 43, 2 * HIDDEN, HIDDEN),
        "bond_emb": dense(kg, (10, HIDDEN), 0.05),
        "prot_evo": init_mlp(kg, 1280, 2 * HIDDEN, HIDDEN),
        "prot_aa": init_mlp(kg, 33, 2 * HIDDEN, HIDDEN),
        "blocks": [init_block(kg) for _ in range(depth)],
        "drug_seq_emb": drug_seq,
        "prot_seq_emb": prot_seq,
        "blocks_1d": [init_block_1d(kg) for _ in range(depth)],
        "rescal_M": dense(kg, (HIDDEN, HIDDEN), 0.02),
    }


def mifdti_forward(params, data, depth, num_graphs):
    atom_x = (params["atom_type_emb"][data["mol_x"].squeeze(-1)]
              + mlp_forward(params["atom_feat_mlp"], data["mol_x_feat"]))
    bond_x = params["bond_emb"][data["mol_edge_attr"]]
    aa_x = (mlp_forward(params["prot_aa"], data["prot_node_aa"])
            + mlp_forward(params["prot_evo"], data["prot_node_evo"]))
    aa_edge_attr = rbf(data["prot_edge_weight"], 1.0, HIDDEN)

    drug_repr, prot_repr = [], []
    for i in range(depth):
        atom_x, aa_x, _dglob, pglob = mif_block(
            params["blocks"][i], atom_x, data["mol_edge_index"], bond_x,
            data["mol_x_batch"], aa_x, data["prot_edge_index"], aa_edge_attr,
            data["prot_node_aa_batch"], data["m2p_edge_index"], num_graphs)
        dglob = atom_x[data["level2_idx"]]           # atom_x[mol_node_levels == 2]
        drug_repr.append(dglob)
        prot_repr.append(pglob)

    atom_x_seq = params["drug_seq_emb"][data["mol_smiles_x"]]    # (B, Ld, 200)
    aa_x_seq = params["prot_seq_emb"][data["prot_seq_x"]]        # (B, Lp, 200)
    for i in range(depth):
        atom_x_seq, aa_x_seq, dpool, ppool = mif_block_1d(
            params["blocks_1d"][i], atom_x_seq, aa_x_seq)
        drug_repr.append(dpool)
        prot_repr.append(ppool)

    drug_repr = jnp.stack(drug_repr, axis=-2)        # (B, 2*depth, 200)
    prot_repr = jnp.stack(prot_repr, axis=-2)
    return rescal_score(drug_repr, prot_repr, params["rescal_M"])


# ----------------------------------------------------------------------------
# Synthetic data + run
# ----------------------------------------------------------------------------
def make_data(seed=0, B=2, atoms_per_mol=12, aas_per_prot=16, Ld=48, Lp=64):
    key = jax.random.PRNGKey(seed)
    ks = jax.random.split(key, 12)
    Na = B * atoms_per_mol
    Np = B * aas_per_prot

    def chain_edges(n_per, nb):
        e = []
        for g in range(nb):
            base = g * n_per
            for i in range(n_per - 1):
                e.append((base + i, base + i + 1))
                e.append((base + i + 1, base + i))
        return np.asarray(e, dtype=np.int32).T

    mol_edge_index = jnp.asarray(chain_edges(atoms_per_mol, B))
    prot_edge_index = jnp.asarray(chain_edges(aas_per_prot, B))
    Ea, Ep = mol_edge_index.shape[1], prot_edge_index.shape[1]

    m2p = []
    for g in range(B):
        for i in range(aas_per_prot):
            m2p.append((g * atoms_per_mol + (i % atoms_per_mol),
                        g * aas_per_prot + i))
    m2p_edge_index = jnp.asarray(np.asarray(m2p, dtype=np.int32).T)

    mol_node_levels = np.zeros((Na,), dtype=np.int32)
    mol_node_levels[::atoms_per_mol] = 2                 # one super-node per mol
    level2_idx = jnp.asarray(np.where(mol_node_levels == 2)[0].astype(np.int32))

    data = {
        "mol_x": jax.random.randint(ks[0], (Na, 1), 0, 20, dtype=jnp.int32),
        "mol_x_feat": jax.random.normal(ks[1], (Na, 43), dtype=jnp.float32),
        "mol_smiles_x": jax.random.randint(ks[2], (B, Ld), 1, 65, dtype=jnp.int32),
        "mol_edge_index": mol_edge_index,
        "mol_edge_attr": jax.random.randint(ks[3], (Ea,), 0, 10, dtype=jnp.int32),
        "level2_idx": level2_idx,
        "prot_node_aa": jax.random.normal(ks[4], (Np, 33), dtype=jnp.float32),
        "prot_node_evo": jax.random.normal(ks[5], (Np, 1280), dtype=jnp.float32),
        "prot_seq_x": jax.random.randint(ks[6], (B, Lp), 1, 26, dtype=jnp.int32),
        "prot_edge_index": prot_edge_index,
        "prot_edge_weight": jax.random.uniform(ks[7], (Ep,), dtype=jnp.float32),
        "mol_x_batch": jnp.asarray(np.repeat(np.arange(B), atoms_per_mol).astype(np.int32)),
        "prot_node_aa_batch": jnp.asarray(np.repeat(np.arange(B), aas_per_prot).astype(np.int32)),
        "m2p_edge_index": m2p_edge_index,
    }
    return data, B


if __name__ == "__main__":
    data, B = make_data(seed=0)
    params = init_params(seed=0, depth=DEPTH)
    scores = mifdti_forward(params, data, DEPTH, B)
    scores = jax.block_until_ready(scores)
    assert scores.shape == (B,) and bool(jnp.all(jnp.isfinite(scores)))
    print("KERNEL_OK")
</pallas_src>

<mosaic_0001>
module attributes {stable_mosaic.version = 11 : i64} {
  func.func @_mlp_kernel(%arg0: i32, %arg1: memref<24x43xf32, #tpu.memory_space<vmem>>, %arg2: memref<43x400xbf16, #tpu.memory_space<vmem>>, %arg3: memref<1x400xf32, #tpu.memory_space<vmem>>, %arg4: memref<400x200xbf16, #tpu.memory_space<vmem>>, %arg5: memref<1x200xf32, #tpu.memory_space<vmem>>, %arg6: memref<1x200xf32, #tpu.memory_space<vmem>>, %arg7: memref<1x200xf32, #tpu.memory_space<vmem>>, %arg8: memref<24x200xf32, #tpu.memory_space<vmem>>) attributes {dimension_semantics = [#tpu.dimension_semantics<parallel>], iteration_bounds = array<i64: 1>, scalar_prefetch = 0 : i64, scratch_operands = 0 : i64, tpu.core_type = #tpu.core_type<tc>, window_params = [{transform_indices = @transform_0, window_bounds = array<i64: 24, 43>}, {pipeline_mode = #tpu.pipeline_mode<synchronous>, transform_indices = @transform_1, window_bounds = array<i64: 43, 400>}, {pipeline_mode = #tpu.pipeline_mode<synchronous>, transform_indices = @transform_2, window_bounds = array<i64: 1, 400>}, {pipeline_mode = #tpu.pipeline_mode<synchronous>, transform_indices = @transform_3, window_bounds = array<i64: 400, 200>}, {pipeline_mode = #tpu.pipeline_mode<synchronous>, transform_indices = @transform_4, window_bounds = array<i64: 1, 200>}, {pipeline_mode = #tpu.pipeline_mode<synchronous>, transform_indices = @transform_5, window_bounds = array<i64: 1, 200>}, {pipeline_mode = #tpu.pipeline_mode<synchronous>, transform_indices = @transform_6, window_bounds = array<i64: 1, 200>}, {transform_indices = @transform_7, window_bounds = array<i64: 24, 200>}]} {
    %c0 = arith.constant 0 : index
    %c0_0 = arith.constant 0 : index
    %0 = vector.load %arg1[%c0, %c0_0] : memref<24x43xf32, #tpu.memory_space<vmem>>, vector<24x43xf32>
    %1 = arith.truncf %0 : vector<24x43xf32> to vector<24x43xbf16>
    %c0_1 = arith.constant 0 : index
    %c0_2 = arith.constant 0 : index
    %2 = vector.load %arg2[%c0_1, %c0_2] : memref<43x400xbf16, #tpu.memory_space<vmem>>, vector<43x400xbf16>
    %cst = arith.constant dense<0.000000e+00> : vector<24x400xf32>
    %3 = tpu.matmul %1, %2, %cst {dimension_numbers = #tpu.dot_dimension_numbers<[1], [0], [0], [1], [0, 0, 1, 1], [], []>} : vector<24x43xbf16>, vector<43x400xbf16>, vector<24x400xf32> -> vector<24x400xf32>
    %c0_3 = arith.constant 0 : index
    %c0_4 = arith.constant 0 : index
    %4 = vector.load %arg3[%c0_3, %c0_4] : memref<1x400xf32, #tpu.memory_space<vmem>>, vector<1x400xf32>
    %5 = vector.broadcast %4 : vector<1x400xf32> to vector<24x400xf32>
    %6 = arith.addf %3, %5 : vector<24x400xf32>
    %cst_5 = arith.constant 0.000000e+00 : f32
    %7 = vector.broadcast %cst_5 : f32 to vector<24x400xf32>
    %8 = arith.maximumf %6, %7 : vector<24x400xf32>
    %9 = arith.truncf %8 : vector<24x400xf32> to vector<24x400xbf16>
    %c0_6 = arith.constant 0 : index
    %c0_7 = arith.constant 0 : index
    %10 = vector.load %arg4[%c0_6, %c0_7] : memref<400x200xbf16, #tpu.memory_space<vmem>>, vector<400x200xbf16>
    %cst_8 = arith.constant dense<0.000000e+00> : vector<24x200xf32>
    %11 = tpu.matmul %9, %10, %cst_8 {dimension_numbers = #tpu.dot_dimension_numbers<[1], [0], [0], [1], [0, 0, 1, 1], [], []>} : vector<24x400xbf16>, vector<400x200xbf16>, vector<24x200xf32> -> vector<24x200xf32>
    %c0_9 = arith.constant 0 : index
    %c0_10 = arith.constant 0 : index
    %12 = vector.load %arg5[%c0_9, %c0_10] : memref<1x200xf32, #tpu.memory_space<vmem>>, vector<1x200xf32>
    %13 = vector.broadcast %12 : vector<1x200xf32> to vector<24x200xf32>
    %14 = arith.addf %11, %13 : vector<24x200xf32>
    %cst_11 = arith.constant dense<0.000000e+00> : vector<24xf32>
    %15 = vector.multi_reduction <add>, %14, %cst_11 [1] : vector<24x200xf32> to vector<24xf32>
    %16 = vector.shape_cast %15 : vector<24xf32> to vector<24x1xf32>
    %cst_12 = arith.constant 2.000000e+02 : f32
    %17 = vector.broadcast %cst_12 : f32 to vector<24x1xf32>
    %18 = arith.divf %16, %17 : vector<24x1xf32>
    %19 = vector.broadcast %18 : vector<24x1xf32> to vector<24x200xf32>
    %20 = arith.subf %14, %19 : vector<24x200xf32>
    %21 = arith.mulf %20, %20 : vector<24x200xf32>
    %cst_13 = arith.constant dense<0.000000e+00> : vector<24xf32>
    %22 = vector.multi_reduction <add>, %21, %cst_13 [1] : vector<24x200xf32> to vector<24xf32>
    %23 = vector.shape_cast %22 : vector<24xf32> to vector<24x1xf32>
    %cst_14 = arith.constant 2.000000e+02 : f32
    %24 = vector.broadcast %cst_14 : f32 to vector<24x1xf32>
    %25 = arith.divf %23, %24 : vector<24x1xf32>
    %26 = vector.broadcast %18 : vector<24x1xf32> to vector<24x200xf32>
    %27 = arith.subf %14, %26 : vector<24x200xf32>
    %cst_15 = arith.constant 9.99999974E-6 : f32
    %28 = vector.broadcast %cst_15 : f32 to vector<24x1xf32>
    %29 = arith.addf %25, %28 : vector<24x1xf32>
    %30 = math.rsqrt %29 : vector<24x1xf32>
    %31 = vector.broadcast %30 : vector<24x1xf32> to vector<24x200xf32>
    %32 = arith.mulf %27, %31 : vector<24x200xf32>
    %c0_16 = arith.constant 0 : index
    %c0_17 = arith.constant 0 : index
    %33 = vector.load %arg6[%c0_16, %c0_17] : memref<1x200xf32, #tpu.memory_space<vmem>>, vector<1x200xf32>
    %34 = vector.broadcast %33 : vector<1x200xf32> to vector<24x200xf32>
    %35 = arith.mulf %32, %34 : vector<24x200xf32>
    %c0_18 = arith.constant 0 : index
    %c0_19 = arith.constant 0 : index
    %36 = vector.load %arg7[%c0_18, %c0_19] : memref<1x200xf32, #tpu.memory_space<vmem>>, vector<1x200xf32>
    %37 = vector.broadcast %36 : vector<1x200xf32> to vector<24x200xf32>
    %38 = arith.addf %35, %37 : vector<24x200xf32>
    %c0_20 = arith.constant 0 : index
    %c0_21 = arith.constant 0 : index
    %39 = vector.load %arg8[%c0_20, %c0_21] : memref<24x200xf32, #tpu.memory_space<vmem>>, vector<24x200xf32>
    tpu.vector_store %arg8[%c0_20, %c0_21], %38 {strides = array<i32>} : memref<24x200xf32, #tpu.memory_space<vmem>>, vector<24x200xf32>,
    return
  }
  func.func @transform_0(%arg0: i32) -> (i32, i32) {
    %c0_i32 = arith.constant 0 : i32
    %c0_i32_0 = arith.constant 0 : i32
    return %arg0, %c0_i32 : i32, i32
  }
  func.func @transform_1(%arg0: i32) -> (i32, i32) {
    %c0_i32 = arith.constant 0 : i32
    %c0_i32_0 = arith.constant 0 : i32
    %c0_i32_1 = arith.constant 0 : i32
    return %c0_i32, %c0_i32_0 : i32, i32
  }
  func.func @transform_2(%arg0: i32) -> (i32, i32) {
    %c0_i32 = arith.constant 0 : i32
    %c0_i32_0 = arith.constant 0 : i32
    %c0_i32_1 = arith.constant 0 : i32
    return %c0_i32, %c0_i32_0 : i32, i32
  }
  func.func @transform_3(%arg0: i32) -> (i32, i32) {
    %c0_i32 = arith.constant 0 : i32
    %c0_i32_0 = arith.constant 0 : i32
    %c0_i32_1 = arith.constant 0 : i32
    return %c0_i32, %c0_i32_0 : i32, i32
  }
  func.func @transform_4(%arg0: i32) -> (i32, i32) {
    %c0_i32 = arith.constant 0 : i32
    %c0_i32_0 = arith.constant 0 : i32
    %c0_i32_1 = arith.constant 0 : i32
    return %c0_i32, %c0_i32_0 : i32, i32
  }
  func.func @transform_5(%arg0: i32) -> (i32, i32) {
    %c0_i32 = arith.constant 0 : i32
    %c0_i32_0 = arith.constant 0 : i32
    %c0_i32_1 = arith.constant 0 : i32
    return %c0_i32, %c0_i32_0 : i32, i32
  }
  func.func @transform_6(%arg0: i32) -> (i32, i32) {
    %c0_i32 = arith.constant 0 : i32
    %c0_i32_0 = arith.constant 0 : i32
    %c0_i32_1 = arith.constant 0 : i32
    return %c0_i32, %c0_i32_0 : i32, i32
  }
  func.func @transform_7(%arg0: i32) -> (i32, i32) {
    %c0_i32 = arith.constant 0 : i32
    %c0_i32_0 = arith.constant 0 : i32
    return %arg0, %c0_i32 : i32, i32
  }
}

</mosaic_0001>

<llo_original>
// kernel: mlp_forward.1
$region0: #{mlp_forward.1}
  #allocation0 [shape = 'u32[]', space=smem, size = 0x4, offset = 0x4, fixed_abs, tag = 'smem constant byte address 0x4 - core index']
  #allocation1 [shape = 'u32[144,128]{1,0:T(1,128)}', space=vmem, size = 0x12000, scoped, tag = 'internal scratch']
  %s0 = inlined_call_operand.hbm [shape: f32[24,43], index: 0, kind: input, shape index: {}]
  %s1 = inlined_call_operand.hbm [shape: bf16[43,400], index: 1, kind: input, shape index: {}]
  %s2 = inlined_call_operand.vmem [shape: f32[1,400], index: 2, kind: input, shape index: {}]
  %s3 = inlined_call_operand.hbm [shape: bf16[400,200], index: 3, kind: input, shape index: {}]
  %s4 = inlined_call_operand.vmem [shape: f32[1,200], index: 4, kind: input, shape index: {}]
  %s5 = inlined_call_operand.vmem [shape: f32[1,200], index: 5, kind: input, shape index: {}]
  %s6 = inlined_call_operand.vmem [shape: f32[1,200], index: 6, kind: input, shape index: {}]
  %s7 = inlined_call_operand.hbm [shape: f32[24,200], index: 7, kind: output, shape index: {}]
  %s8 = sld [smem:[#allocation0]]
  $region50: #{mlp_forward.1} parent=0
    _
  %s10 = ssub.s32 1, %s8
  %s11 = scalar_select 0, %s10, %s8
  $region1: #{mlp_forward.1} parent=0
    #allocation2 [shape = 'u8[12288]{0}', space=vmem, size = 0x3000, scoped, tag = 'input window, operand 0, single buffered']
    #allocation3 [shape = 's32[1]{0}', space=sflag, size = 0x4, scoped, tag = 'scoped memory for mlp_forward.1']
    #allocation4 [shape = 's32[1]{0}', space=sflag, size = 0x4, scoped, tag = 'scoped memory for mlp_forward.1']
    #allocation5 [shape = 'u8[49152]{0}', space=vmem, size = 0xc000, scoped, tag = 'input window, operand 1, single buffered']
    #allocation6 [shape = 's32[1]{0}', space=sflag, size = 0x4, scoped, tag = 'scoped memory for mlp_forward.1']
    #allocation7 [shape = 'u8[204800]{0}', space=vmem, size = 0x32000, scoped, tag = 'input window, operand 3, single buffered']
    #allocation8 [shape = 'u8[24576]{0}', space=vmem, size = 0x6000, scoped, tag = 'output window, operand 0, single buffered']
    %12 = vsyncpa [#allocation3], 0
    %13 = vsyncpa [#allocation6], 0
    %14 = vsyncpa [#allocation4], 0
    // Predicated region
    $region2: #{mlp_forward.1} parent=1 // pred_check
      _
    $region3: #{mlp_forward.1} parent=1 // pred_check_branch
      %16 = sbr.rel (0) target = $region5
    $region4: #{mlp_forward.1} parent=1 // pred_region
      %s18 = ssub.s32 384, 384
      %19 = vsyncadd [#allocation3], %s18
      %s20 = sshll.u32 [#allocation2], 4
      %s21 = int_to_ptr.vmem [resolvable:$true] %s20
      %26 = dma.hbm_to_vmem [thread:$0]  %s0, 384, %s21, [#allocation3], 128, 128, 8
    $region5: #{mlp_forward.1} parent=1 // pred_fallthru
      _
    // Predicated region
    $region6: #{mlp_forward.1} parent=1 // pred_check
      _
    $region7: #{mlp_forward.1} parent=1 // pred_check_branch
      %28 = sbr.rel (0) target = $region9
    $region8: #{mlp_forward.1} parent=1 // pred_region
      %s30 = ssub.s32 1536, 1536
      %31 = vsyncadd [#allocation6], %s30
      %s32 = sshll.u32 [#allocation5], 4
      %s33 = int_to_ptr.vmem [resolvable:$true] %s32
      %38 = dma.hbm_to_vmem [thread:$0]  %s1, 1536, %s33, [#allocation6], 256, 256, 16
    $region9: #{mlp_forward.1} parent=1 // pred_fallthru
      _
    // Predicated region
    $region10: #{mlp_forward.1} parent=1 // pred_check
      _
    $region11: #{mlp_forward.1} parent=1 // pred_check_branch
      %40 = sbr.rel (0) target = $region13
    $region12: #{mlp_forward.1} parent=1 // pred_region
      _
    $region13: #{mlp_forward.1} parent=1 // pred_fallthru
      _
    // Predicated region
    $region14: #{mlp_forward.1} parent=1 // pred_check
      _
    $region15: #{mlp_forward.1} parent=1 // pred_check_branch
      %42 = sbr.rel (0) target = $region17
    $region16: #{mlp_forward.1} parent=1 // pred_region
      %s44 = ssub.s32 6400, 6400
      %45 = vsyncadd [#allocation6], %s44
      %s46 = sshll.u32 [#allocation7], 4
      %s47 = int_to_ptr.vmem [resolvable:$true] %s46
      %52 = dma.hbm_to_vmem [thread:$0]  %s3, 6400, %s47, [#allocation6], 128, 128, 8
    $region17: #{mlp_forward.1} parent=1 // pred_fallthru
      _
    // Predicated region
    $region18: #{mlp_forward.1} parent=1 // pred_check
      _
    $region19: #{mlp_forward.1} parent=1 // pred_check_branch
      %54 = sbr.rel (0) target = $region21
    $region20: #{mlp_forward.1} parent=1 // pred_region
      _
    $region21: #{mlp_forward.1} parent=1 // pred_fallthru
      _
    // Predicated region
    $region22: #{mlp_forward.1} parent=1 // pred_check
      _
    $region23: #{mlp_forward.1} parent=1 // pred_check_branch
      %56 = sbr.rel (0) target = $region25
    $region24: #{mlp_forward.1} parent=1 // pred_region
      _
    $region25: #{mlp_forward.1} parent=1 // pred_fallthru
      _
    // Predicated region
    $region26: #{mlp_forward.1} parent=1 // pred_check
      _
    $region27: #{mlp_forward.1} parent=1 // pred_check_branch
      %58 = sbr.rel (0) target = $region29
    $region28: #{mlp_forward.1} parent=1 // pred_region
      _
    $region29: #{mlp_forward.1} parent=1 // pred_fallthru
      _
    // Predicated region
    $region30: #{mlp_forward.1} parent=1 // pred_check
      _
    $region31: #{mlp_forward.1} parent=1 // pred_check_branch
      %60 = sbr.rel (0) target = $region33
    $region32: #{mlp_forward.1} parent=1 // pred_region
      %61 = dma.done [#allocation3], 384
    $region33: #{mlp_forward.1} parent=1 // pred_fallthru
      _
    // Predicated region
    $region34: #{mlp_forward.1} parent=1 // pred_check
      _
    $region35: #{mlp_forward.1} parent=1 // pred_check_branch
      %63 = sbr.rel (0) target = $region37
    $region36: #{mlp_forward.1} parent=1 // pred_region
      %64 = dma.done [#allocation6], 1536
    $region37: #{mlp_forward.1} parent=1 // pred_fallthru
      _
    // Predicated region
    $region38: #{mlp_forward.1} parent=1 // pred_check
      _
    $region39: #{mlp_forward.1} parent=1 // pred_check_branch
      %66 = sbr.rel (0) target = $region41
    $region40: #{mlp_forward.1} parent=1 // pred_region
      %67 = dma.done [#allocation6], 6400
    $region41: #{mlp_forward.1} parent=1 // pred_fallthru
      _
    %v69 = vld [vmem:[#allocation2] sm:$0xff]
    %v70 = vld [vmem:[#allocation2 + $0x8] sm:$0xff]
    %v71 = vld [vmem:[#allocation2 + $0x10] sm:$0xff]
    %v72 = vpack.c.bf16 %v70, %v69
    %v73 = vpack.c.bf16 %v71, %v71
    %v74 = vld [vmem:[#allocation5] sm:$0xff]
    %v75 = vld [vmem:[#allocation5 + $0x8] sm:$0xff]
    %v76 = vld [vmem:[#allocation5 + $0x10] sm:$0xff]
    %v77 = vld [vmem:[#allocation5 + $0x18] sm:$0xff]
    %v78 = vld [vmem:[#allocation5 + $0x20] sm:$0xff]
    %v79 = vld [vmem:[#allocation5 + $0x28] sm:$0xff]
    %v80 = vld [vmem:[#allocation5 + $0x30] sm:$0xff]
    %v81 = vld [vmem:[#allocation5 + $0x38] sm:$0xff]
    %v82 = vld [vmem:[#allocation5 + $0x40] sm:$0xff]
    %v83 = vld [vmem:[#allocation5 + $0x48] sm:$0xff]
    %v84 = vld [vmem:[#allocation5 + $0x50] sm:$0x33]
    %v85 = vld [vmem:[#allocation5 + $0x58] sm:$0x33]
    %v86 = vld [vmem:[%s2] sm:$0xf]
    %v88 = vlaneseq
    %v89 = vshrl.u32 %v88, 7
    %v90 = vsub.s32 0, %v89
    %v91 = vrot.slane %v86, %v90
    %v92 = vlaneseq
    %v93 = vshrl.u32 %v92, 7
    %v94 = vsub.s32 1, %v93
    %v95 = vrot.slane %v86, %v94
    %v96 = vlaneseq
    %v97 = vshrl.u32 %v96, 7
    %v98 = vsub.s32 2, %v97
    %v99 = vrot.slane %v86, %v98
    %v100 = vlaneseq
    %v101 = vshrl.u32 %v100, 7
    %v102 = vsub.s32 3, %v101
    %v103 = vrot.slane %v86, %v102
    %v120 = vunpack.c.l.b16 %v74
    %v121 = vunpack.c.h.b16 %v74
    %v122 = vunpack.c.l.b16 %v75
    %v123 = vunpack.c.h.b16 %v75
    %v124 = vunpack.c.l.b16 %v76
    %v125 = vunpack.c.h.b16 %v76
    %v126 = vunpack.c.l.b16 %v77
    %v127 = vunpack.c.h.b16 %v77
    %v128 = vunpack.c.l.b16 %v78
    %v129 = vunpack.c.h.b16 %v78
    %v130 = vunpack.c.l.b16 %v79
    %v131 = vunpack.c.h.b16 %v79
    %v132 = vunpack.c.l.b16 %v80
    %v133 = vunpack.c.h.b16 %v80
    %v134 = vunpack.c.l.b16 %v81
    %v135 = vunpack.c.h.b16 %v81
    %v136 = vunpack.c.l.b16 %v82
    %v137 = vunpack.c.h.b16 %v82
    %v138 = vunpack.c.l.b16 %v83
    %v139 = vunpack.c.h.b16 %v83
    %v140 = vunpack.c.l.b16 %v84
    %v141 = vunpack.c.h.b16 %v84
    %v142 = vunpack.c.l.b16 %v85
    %v143 = vunpack.c.h.b16 %v85
    %v144 = vpack.c.b16 %v124, %v120
    %v145 = vpack.c.b16 %v125, %v121
    %v146 = vpack.c.b16 %v126, %v122
    %v147 = vpack.c.b16 %v127, %v123
    %v148 = vpack.c.b16 %v132, %v128
    %v149 = vpack.c.b16 %v133, %v129
    %v150 = vpack.c.b16 %v134, %v130
    %v151 = vpack.c.b16 %v135, %v131
    %v152 = vpack.c.b16 %v140, %v136
    %v153 = vpack.c.b16 %v141, %v137
    %v154 = vpack.c.b16 %v142, %v138
    %v155 = vpack.c.b16 %v143, %v139
    %vm164 = vcmask 351232
    %v166 = vsel %vm164, %v72, 0
    %v169 = vsel %vm164, %v73, 0
    %vm171 = vcmask 1044480
    %vm172 = vcmask 1045504
    %v173 = vsel %vm171, 4294967295, 65535
    %v174 = vsel %vm172, %v173, 0
    %v176 = vand.u32 %v152, %v174
    %v179 = vand.u32 %v153, %v174
    %v182 = vand.u32 %v154, %v174
    %v185 = vand.u32 %v155, %v174
    %187 = vmatprep.subr.bf16.mxu0 0
    %188 = vmatpush1.bf16.msra.mxu0 0
    %189 = vmatprep.subr.bf16.mxu0 0
    %190 = vmatpush1.bf16.msra.mxu0 0
    %191 = vmatprep.subr.bf16.mxu0 0
    %192 = vmatpush1.bf16.msra.mxu0 0
    %193 = vmatprep.subr.bf16.mxu0 0
    %194 = vmatpush1.bf16.msra.mxu0 0
    %195 = vmatprep.subr.bf16.mxu0 0
    %196 = vmatpush1.bf16.msra.mxu0 0
    %197 = vmatprep.subr.bf16.mxu0 %v179
    %198 = vmatpush1.bf16.msra.mxu0 %v176
    %199 = vmatprep.subr.bf16.mxu0 %v149
    %200 = vmatpush1.bf16.msra.mxu0 %v148
    %201 = vmatprep.subr.bf16.mxu0 %v145
    %202 = vmatpush1.bf16.msra.mxu0 %v144
    %203 = vmatprep.subr.bf16.mxu0 0
    %204 = vmatpush2.bf16.msra.mxu0 0
    %205 = vmatprep.subr.bf16.mxu0 0
    %206 = vmatpush2.bf16.msra.mxu0 0
    %207 = vmatprep.subr.bf16.mxu0 0
    %208 = vmatpush2.bf16.msra.mxu0 0
    %209 = vmatprep.subr.bf16.mxu0 0
    %210 = vmatpush2.bf16.msra.mxu0 0
    %211 = vmatprep.subr.bf16.mxu0 0
    %212 = vmatpush2.bf16.msra.mxu0 0
    %213 = vmatprep.subr.bf16.mxu0 0
    %214 = vmatpush2.bf16.msra.mxu0 0
    %215 = vmatprep.subr.bf16.mxu0 0
    %216 = vmatpush2.bf16.msra.mxu0 0
    %217 = vmatprep.subr.bf16.mxu0 0
    %218 = vmatpush2.bf16.msra.mxu0 0
    %219 = vmatprep.mubr.bf16.mxu0 0
    %220 = vmatmul.mubr.bf16.gmra.mxu0 %v166
    %v221 = vpop.f32.mrf.mxu0
    %v222 = vadd.f32 %v91, %v221
    %v223 = vpop.f32.mrf.mxu0
    %v224 = vadd.f32 %v95, %v223
    %v225 = vpop.f32.mrf.mxu0
    %v226 = vadd.f32 %v91, %v225
    %v227 = vpop.f32.mrf.mxu0
    %v228 = vadd.f32 %v95, %v227
    %229 = vmatprep.mubr.bf16.mxu0 0
    %230 = vmatmul.mubr.bf16.gmra.mxu0 %v169
    %v231 = vpop.f32.mrf.mxu0
    %v232 = vadd.f32 %v91, %v231
    %v233 = vpop.f32.mrf.mxu0
    %v234 = vadd.f32 %v95, %v233
    %v235 = vpop.f32.mrf.mxu0
    %v236 = vpop.f32.mrf.mxu0
    %237 = vdwg.mxu0
    %238 = vmatprep.subr.bf16.mxu0 0
    %239 = vmatpush1.bf16.msra.mxu0 0
    %240 = vmatprep.subr.bf16.mxu0 0
    %241 = vmatpush1.bf16.msra.mxu0 0
    %242 = vmatprep.subr.bf16.mxu0 0
    %243 = vmatpush1.bf16.msra.mxu0 0
    %244 = vmatprep.subr.bf16.mxu0 0
    %245 = vmatpush1.bf16.msra.mxu0 0
    %246 = vmatprep.subr.bf16.mxu0 0
    %247 = vmatpush1.bf16.msra.mxu0 0
    %248 = vmatprep.subr.bf16.mxu0 %v185
    %249 = vmatpush1.bf16.msra.mxu0 %v182
    %250 = vmatprep.subr.bf16.mxu0 %v151
    %251 = vmatpush1.bf16.msra.mxu0 %v150
    %252 = vmatprep.subr.bf16.mxu0 %v147
    %253 = vmatpush1.bf16.msra.mxu0 %v146
    %254 = vmatprep.subr.bf16.mxu0 0
    %255 = vmatpush2.bf16.msra.mxu0 0
    %256 = vmatprep.subr.bf16.mxu0 0
    %257 = vmatpush2.bf16.msra.mxu0 0
    %258 = vmatprep.subr.bf16.mxu0 0
    %259 = vmatpush2.bf16.msra.mxu0 0
    %260 = vmatprep.subr.bf16.mxu0 0
    %261 = vmatpush2.bf16.msra.mxu0 0
    %262 = vmatprep.subr.bf16.mxu0 0
    %263 = vmatpush2.bf16.msra.mxu0 0
    %264 = vmatprep.subr.bf16.mxu0 0
    %265 = vmatpush2.bf16.msra.mxu0 0
    %266 = vmatprep.subr.bf16.mxu0 0
    %267 = vmatpush2.bf16.msra.mxu0 0
    %268 = vmatprep.subr.bf16.mxu0 0
    %269 = vmatpush2.bf16.msra.mxu0 0
    %270 = vmatprep.mubr.bf16.mxu0 0
    %271 = vmatmul.mubr.bf16.gmra.mxu0 %v166
    %v272 = vpop.f32.mrf.mxu0
    %v273 = vadd.f32 %v99, %v272
    %v274 = vpop.f32.mrf.mxu0
    %v275 = vadd.f32 %v103, %v274
    %v276 = vpop.f32.mrf.mxu0
    %v277 = vadd.f32 %v99, %v276
    %v278 = vpop.f32.mrf.mxu0
    %v279 = vadd.f32 %v103, %v278
    %280 = vmatprep.mubr.bf16.mxu0 0
    %281 = vmatmul.mubr.bf16.gmra.mxu0 %v169
    %v282 = vpop.f32.mrf.mxu0
    %v283 = vadd.f32 %v99, %v282
    %v284 = vpop.f32.mrf.mxu0
    %v285 = vadd.f32 %v103, %v284
    %v286 = vpop.f32.mrf.mxu0
    %v287 = vpop.f32.mrf.mxu0
    %288 = vdwg.mxu0
    %v289 = vmax.f32 %v222, 0.0
    %v290 = vmax.f32 %v224, 0.0
    %v291 = vmax.f32 %v273, 0.0
    %v292 = vmax.f32 %v275, 0.0
    %v293 = vmax.f32 %v226, 0.0
    %v294 = vmax.f32 %v228, 0.0
    %v295 = vmax.f32 %v277, 0.0
    %v296 = vmax.f32 %v279, 0.0
    %v297 = vmax.f32 %v232, 0.0
    %v298 = vmax.f32 %v234, 0.0
    %v299 = vmax.f32 %v283, 0.0
    %v300 = vmax.f32 %v285, 0.0
    %v301 = vpack.c.bf16 %v293, %v289
    %v302 = vpack.c.bf16 %v294, %v290
    %v303 = vpack.c.bf16 %v295, %v291
    %v304 = vpack.c.bf16 %v296, %v292
    %v305 = vpack.c.bf16 %v297, %v297
    %v306 = vpack.c.bf16 %v298, %v298
    %v307 = vpack.c.bf16 %v299, %v299
    %v308 = vpack.c.bf16 %v300, %v300
    %v309 = vld [vmem:[#allocation7] sm:$0xff]
    %v310 = vld [vmem:[#allocation7 + $0x8] sm:$0xff]
    %v311 = vld [vmem:[#allocation7 + $0x10] sm:$0xff]
    %v312 = vld [vmem:[#allocation7 + $0x18] sm:$0xff]
    %v313 = vld [vmem:[#allocation7 + $0x20] sm:$0xff]
    %v314 = vld [vmem:[#allocation7 + $0x28] sm:$0xff]
    %v315 = vld [vmem:[#allocation7 + $0x30] sm:$0xff]
    %v316 = vld [vmem:[#allocation7 + $0x38] sm:$0xff]
    %v317 = vld [vmem:[#allocation7 + $0x40] sm:$0xff]
    %v318 = vld [vmem:[#allocation7 + $0x48] sm:$0xff]
    %v319 = vld [vmem:[#allocation7 + $0x50] sm:$0xff]
    %v320 = vld [vmem:[#allocation7 + $0x58] sm:$0xff]
    %v321 = vld [vmem:[#allocation7 + $0x60] sm:$0xff]
    %v322 = vld [vmem:[#allocation7 + $0x68] sm:$0xff]
    %v323 = vld [vmem:[#allocation7 + $0x70] sm:$0xff]
    %v324 = vld [vmem:[#allocation7 + $0x78] sm:$0xff]
    %v325 = vld [vmem:[#allocation7 + $0x80] sm:$0xff]
    %v326 = vld [vmem:[#allocation7 + $0x88] sm:$0xff]
    %v327 = vld [vmem:[#allocation7 + $0x90] sm:$0xff]
    %v328 = vld [vmem:[#allocation7 + $0x98] sm:$0xff]
    %v329 = vld [vmem:[#allocation7 + $0xa0] sm:$0xff]
    %v330 = vld [vmem:[#allocation7 + $0xa8] sm:$0xff]
    %v331 = vld [vmem:[#allocation7 + $0xb0] sm:$0xff]
    %v332 = vld [vmem:[#allocation7 + $0xb8] sm:$0xff]
    %v333 = vld [vmem:[#allocation7 + $0xc0] sm:$0xff]
    %v334 = vld [vmem:[#allocation7 + $0xc8] sm:$0xff]
    %v335 = vld [vmem:[#allocation7 + $0xd0] sm:$0xff]
    %v336 = vld [vmem:[#allocation7 + $0xd8] sm:$0xff]
    %v337 = vld [vmem:[#allocation7 + $0xe0] sm:$0xff]
    %v338 = vld [vmem:[#allocation7 + $0xe8] sm:$0xff]
    %v339 = vld [vmem:[#allocation7 + $0xf0] sm:$0xff]
    %v340 = vld [vmem:[#allocation7 + $0xf8] sm:$0xff]
    %v341 = vld [vmem:[#allocation7 + $0x100] sm:$0xff]
    %v342 = vld [vmem:[#allocation7 + $0x108] sm:$0xff]
    %v343 = vld [vmem:[#allocation7 + $0x110] sm:$0xff]
    %v344 = vld [vmem:[#allocation7 + $0x118] sm:$0xff]
    %v345 = vld [vmem:[#allocation7 + $0x120] sm:$0xff]
    %v346 = vld [vmem:[#allocation7 + $0x128] sm:$0xff]
    %v347 = vld [vmem:[#allocation7 + $0x130] sm:$0xff]
    %v348 = vld [vmem:[#allocation7 + $0x138] sm:$0xff]
    %v349 = vld [vmem:[#allocation7 + $0x140] sm:$0xff]
    %v350 = vld [vmem:[#allocation7 + $0x148] sm:$0xff]
    %v351 = vld [vmem:[#allocation7 + $0x150] sm:$0xff]
    %v352 = vld [vmem:[#allocation7 + $0x158] sm:$0xff]
    %v353 = vld [vmem:[#allocation7 + $0x160] sm:$0xff]
    %v354 = vld [vmem:[#allocation7 + $0x168] sm:$0xff]
    %v355 = vld [vmem:[#allocation7 + $0x170] sm:$0xff]
    %v356 = vld [vmem:[#allocation7 + $0x178] sm:$0xff]
    %v357 = vld [vmem:[#allocation7 + $0x180] sm:$0xff]
    %v358 = vld [vmem:[#allocation7 + $0x188] sm:$0xff]
    %v359 = vld [vmem:[%s4] sm:$0x3]
    %v361 = vlaneseq
    %v362 = vshrl.u32 %v361, 7
    %v363 = vsub.s32 0, %v362
    %v364 = vrot.slane %v359, %v363
    %v365 = vlaneseq
    %v366 = vshrl.u32 %v365, 7
    %v367 = vsub.s32 1, %v366
    %v368 = vrot.slane %v359, %v367
    %v421 = vunpack.c.l.b16 %v309
    %v422 = vunpack.c.h.b16 %v309
    %v423 = vunpack.c.l.b16 %v310
    %v424 = vunpack.c.h.b16 %v310
    %v425 = vunpack.c.l.b16 %v311
    %v426 = vunpack.c.h.b16 %v311
    %v427 = vunpack.c.l.b16 %v312
    %v428 = vunpack.c.h.b16 %v312
    %v429 = vunpack.c.l.b16 %v313
    %v430 = vunpack.c.h.b16 %v313
    %v431 = vunpack.c.l.b16 %v314
    %v432 = vunpack.c.h.b16 %v314
    %v433 = vunpack.c.l.b16 %v315
    %v434 = vunpack.c.h.b16 %v315
    %v435 = vunpack.c.l.b16 %v316
    %v436 = vunpack.c.h.b16 %v316
    %v437 = vunpack.c.l.b16 %v317
    %v438 = vunpack.c.h.b16 %v317
    %v439 = vunpack.c.l.b16 %v318
    %v440 = vunpack.c.h.b16 %v318
    %v441 = vunpack.c.l.b16 %v319
    %v442 = vunpack.c.h.b16 %v319
    %v443 = vunpack.c.l.b16 %v320
    %v444 = vunpack.c.h.b16 %v320
    %v445 = vunpack.c.l.b16 %v321
    %v446 = vunpack.c.h.b16 %v321
    %v447 = vunpack.c.l.b16 %v322
    %v448 = vunpack.c.h.b16 %v322
    %v449 = vunpack.c.l.b16 %v323
    %v450 = vunpack.c.h.b16 %v323
    %v451 = vunpack.c.l.b16 %v324
    %v452 = vunpack.c.h.b16 %v324
    %v453 = vunpack.c.l.b16 %v325
    %v454 = vunpack.c.h.b16 %v325
    %v455 = vunpack.c.l.b16 %v326
    %v456 = vunpack.c.h.b16 %v326
    %v457 = vunpack.c.l.b16 %v327
    %v458 = vunpack.c.h.b16 %v327
    %v459 = vunpack.c.l.b16 %v328
    %v460 = vunpack.c.h.b16 %v328
    %v461 = vunpack.c.l.b16 %v329
    %v462 = vunpack.c.h.b16 %v329
    %v463 = vunpack.c.l.b16 %v330
    %v464 = vunpack.c.h.b16 %v330
    %v465 = vunpack.c.l.b16 %v331
    %v466 = vunpack.c.h.b16 %v331
    %v467 = vunpack.c.l.b16 %v332
    %v468 = vunpack.c.h.b16 %v332
    %v469 = vunpack.c.l.b16 %v333
    %v470 = vunpack.c.h.b16 %v333
    %v471 = vunpack.c.l.b16 %v334
    %v472 = vunpack.c.h.b16 %v334
    %v473 = vunpack.c.l.b16 %v335
    %v474 = vunpack.c.h.b16 %v335
    %v475 = vunpack.c.l.b16 %v336
    %v476 = vunpack.c.h.b16 %v336
    %v477 = vunpack.c.l.b16 %v337
    %v478 = vunpack.c.h.b16 %v337
    %v479 = vunpack.c.l.b16 %v338
    %v480 = vunpack.c.h.b16 %v338
    %v481 = vunpack.c.l.b16 %v339
    %v482 = vunpack.c.h.b16 %v339
    %v483 = vunpack.c.l.b16 %v340
    %v484 = vunpack.c.h.b16 %v340
    %v485 = vunpack.c.l.b16 %v341
    %v486 = vunpack.c.h.b16 %v341
    %v487 = vunpack.c.l.b16 %v342
    %v488 = vunpack.c.h.b16 %v342
    %v489 = vunpack.c.l.b16 %v343
    %v490 = vunpack.c.h.b16 %v343
    %v491 = vunpack.c.l.b16 %v344
    %v492 = vunpack.c.h.b16 %v344
    %v493 = vunpack.c.l.b16 %v345
    %v494 = vunpack.c.h.b16 %v345
    %v495 = vunpack.c.l.b16 %v346
    %v496 = vunpack.c.h.b16 %v346
    %v497 = vunpack.c.l.b16 %v347
    %v498 = vunpack.c.h.b16 %v347
    %v499 = vunpack.c.l.b16 %v348
    %v500 = vunpack.c.h.b16 %v348
    %v501 = vunpack.c.l.b16 %v349
    %v502 = vunpack.c.h.b16 %v349
    %v503 = vunpack.c.l.b16 %v350
    %v504 = vunpack.c.h.b16 %v350
    %v505 = vunpack.c.l.b16 %v351
    %v506 = vunpack.c.h.b16 %v351
    %v507 = vunpack.c.l.b16 %v352
    %v508 = vunpack.c.h.b16 %v352
    %v509 = vunpack.c.l.b16 %v353
    %v510 = vunpack.c.h.b16 %v353
    %v511 = vunpack.c.l.b16 %v354
    %v512 = vunpack.c.h.b16 %v354
    %v513 = vunpack.c.l.b16 %v355
    %v514 = vunpack.c.h.b16 %v355
    %v515 = vunpack.c.l.b16 %v356
    %v516 = vunpack.c.h.b16 %v356
    %v517 = vunpack.c.l.b16 %v357
    %v518 = vunpack.c.h.b16 %v357
    %v519 = vunpack.c.l.b16 %v358
    %v520 = vunpack.c.h.b16 %v358
    %v521 = vpack.c.b16 %v423, %v421
    %v522 = vpack.c.b16 %v424, %v422
    %v523 = vpack.c.b16 %v427, %v425
    %v524 = vpack.c.b16 %v428, %v426
    %v525 = vpack.c.b16 %v431, %v429
    %v526 = vpack.c.b16 %v432, %v430
    %v527 = vpack.c.b16 %v435, %v433
    %v528 = vpack.c.b16 %v436, %v434
    %v529 = vpack.c.b16 %v439, %v437
    %v530 = vpack.c.b16 %v440, %v438
    %v531 = vpack.c.b16 %v443, %v441
    %v532 = vpack.c.b16 %v444, %v442
    %v533 = vpack.c.b16 %v447, %v445
    %v534 = vpack.c.b16 %v448, %v446
    %v535 = vpack.c.b16 %v451, %v449
    %v536 = vpack.c.b16 %v452, %v450
    %v537 = vpack.c.b16 %v455, %v453
    %v538 = vpack.c.b16 %v456, %v454
    %v539 = vpack.c.b16 %v459, %v457
    %v540 = vpack.c.b16 %v460, %v458
    %v541 = vpack.c.b16 %v463, %v461
    %v542 = vpack.c.b16 %v464, %v462
    %v543 = vpack.c.b16 %v467, %v465
    %v544 = vpack.c.b16 %v468, %v466
    %v545 = vpack.c.b16 %v471, %v469
    %v546 = vpack.c.b16 %v472, %v470
    %v547 = vpack.c.b16 %v475, %v473
    %v548 = vpack.c.b16 %v476, %v474
    %v549 = vpack.c.b16 %v479, %v477
    %v550 = vpack.c.b16 %v480, %v478
    %v551 = vpack.c.b16 %v483, %v481
    %v552 = vpack.c.b16 %v484, %v482
    %v553 = vpack.c.b16 %v487, %v485
    %v554 = vpack.c.b16 %v488, %v486
    %v555 = vpack.c.b16 %v491, %v489
    %v556 = vpack.c.b16 %v492, %v490
    %v557 = vpack.c.b16 %v495, %v493
    %v558 = vpack.c.b16 %v496, %v494
    %v559 = vpack.c.b16 %v499, %v497
    %v560 = vpack.c.b16 %v500, %v498
    %v561 = vpack.c.b16 %v503, %v501
    %v562 = vpack.c.b16 %v504, %v502
    %v563 = vpack.c.b16 %v507, %v505
    %v564 = vpack.c.b16 %v508, %v506
    %v565 = vpack.c.b16 %v511, %v509
    %v566 = vpack.c.b16 %v512, %v510
    %v567 = vpack.c.b16 %v515, %v513
    %v568 = vpack.c.b16 %v516, %v514
    %v569 = vpack.c.b16 %v519, %v517
    %v570 = vpack.c.b16 %v520, %v518
    %vm621 = vcmask 130048
    %v623 = vsel %vm621, %v304, 0
    %v626 = vsel %vm621, %v308, 0
    %628 = vmatprep.subr.bf16.mxu0 %v536
    %629 = vmatpush1.bf16.msra.mxu0 %v535
    %630 = vmatprep.subr.bf16.mxu0 %v534
    %631 = vmatpush1.bf16.msra.mxu0 %v533
    %632 = vmatprep.subr.bf16.mxu0 %v532
    %633 = vmatpush1.bf16.msra.mxu0 %v531
    %634 = vmatprep.subr.bf16.mxu0 %v530
    %635 = vmatpush1.bf16.msra.mxu0 %v529
    %636 = vmatprep.subr.bf16.mxu0 %v528
    %637 = vmatpush1.bf16.msra.mxu0 %v527
    %638 = vmatprep.subr.bf16.mxu0 %v526
    %639 = vmatpush1.bf16.msra.mxu0 %v525
    %640 = vmatprep.subr.bf16.mxu0 %v524
    %641 = vmatpush1.bf16.msra.mxu0 %v523
    %642 = vmatprep.subr.bf16.mxu0 %v522
    %643 = vmatpush1.bf16.msra.mxu0 %v521
    %644 = vmatprep.subr.bf16.mxu0 %v552
    %645 = vmatpush2.bf16.msra.mxu0 %v551
    %646 = vmatprep.subr.bf16.mxu0 %v550
    %647 = vmatpush2.bf16.msra.mxu0 %v549
    %648 = vmatprep.subr.bf16.mxu0 %v548
    %649 = vmatpush2.bf16.msra.mxu0 %v547
    %650 = vmatprep.subr.bf16.mxu0 %v546
    %651 = vmatpush2.bf16.msra.mxu0 %v545
    %652 = vmatprep.subr.bf16.mxu0 %v544
    %653 = vmatpush2.bf16.msra.mxu0 %v543
    %654 = vmatprep.subr.bf16.mxu0 %v542
    %655 = vmatpush2.bf16.msra.mxu0 %v541
    %656 = vmatprep.subr.bf16.mxu0 %v540
    %657 = vmatpush2.bf16.msra.mxu0 %v539
    %658 = vmatprep.subr.bf16.mxu0 %v538
    %659 = vmatpush2.bf16.msra.mxu0 %v537
    %660 = vmatprep.mubr.bf16.mxu0 %v302
    %661 = vmatmul.mubr.bf16.gmra.mxu0 %v301
    %v662 = vpop.f32.mrf.mxu0
    %v663 = vadd.f32 %v364, %v662
    %v664 = vpop.f32.mrf.mxu0
    %v665 = vadd.f32 %v368, %v664
    %v666 = vpop.f32.mrf.mxu0
    %v667 = vadd.f32 %v364, %v666
    %v668 = vpop.f32.mrf.mxu0
    %v669 = vadd.f32 %v368, %v668
    %670 = vmatprep.mubr.bf16.mxu0 %v306
    %671 = vmatmul.mubr.bf16.gmra.mxu0 %v305
    %v672 = vpop.f32.mrf.mxu0
    %v673 = vadd.f32 %v364, %v672
    %v674 = vpop.f32.mrf.mxu0
    %v675 = vadd.f32 %v368, %v674
    %v676 = vpop.f32.mrf.mxu0
    %v677 = vpop.f32.mrf.mxu0
    %678 = vdwg.mxu0
    %679 = vmatprep.subr.bf16.mxu0 %v568
    %680 = vmatpush1.bf16.msra.mxu0 %v567
    %681 = vmatprep.subr.bf16.mxu0 %v566
    %682 = vmatpush1.bf16.msra.mxu0 %v565
    %683 = vmatprep.subr.bf16.mxu0 %v564
    %684 = vmatpush1.bf16.msra.mxu0 %v563
    %685 = vmatprep.subr.bf16.mxu0 %v562
    %686 = vmatpush1.bf16.msra.mxu0 %v561
    %687 = vmatprep.subr.bf16.mxu0 %v560
    %688 = vmatpush1.bf16.msra.mxu0 %v559
    %689 = vmatprep.subr.bf16.mxu0 %v558
    %690 = vmatpush1.bf16.msra.mxu0 %v557
    %691 = vmatprep.subr.bf16.mxu0 %v556
    %692 = vmatpush1.bf16.msra.mxu0 %v555
    %693 = vmatprep.subr.bf16.mxu0 %v554
    %694 = vmatpush1.bf16.msra.mxu0 %v553
    %695 = vmatprep.subr.bf16.mxu0 0
    %696 = vmatpush2.bf16.msra.mxu0 0
    %697 = vmatprep.subr.bf16.mxu0 0
    %698 = vmatpush2.bf16.msra.mxu0 0
    %699 = vmatprep.subr.bf16.mxu0 0
    %700 = vmatpush2.bf16.msra.mxu0 0
    %701 = vmatprep.subr.bf16.mxu0 0
    %702 = vmatpush2.bf16.msra.mxu0 0
    %703 = vmatprep.subr.bf16.mxu0 0
    %704 = vmatpush2.bf16.msra.mxu0 0
    %705 = vmatprep.subr.bf16.mxu0 0
    %706 = vmatpush2.bf16.msra.mxu0 0
    %707 = vmatprep.subr.bf16.mxu0 0
    %708 = vmatpush2.bf16.msra.mxu0 0
    %709 = vmatprep.subr.bf16.mxu0 %v570
    %710 = vmatpush2.bf16.msra.mxu0 %v569
    %711 = vmatprep.mubr.bf16.mxu0 %v623
    %712 = vmatmul.mubr.bf16.gmra.mxu0 %v303
    %v713 = vpop.f32.mrf.mxu0
    %v714 = vadd.f32 %v663, %v713
    %v715 = vpop.f32.mrf.mxu0
    %v716 = vadd.f32 %v665, %v715
    %v717 = vpop.f32.mrf.mxu0
    %v718 = vadd.f32 %v667, %v717
    %v719 = vpop.f32.mrf.mxu0
    %v720 = vadd.f32 %v669, %v719
    %721 = vmatprep.mubr.bf16.mxu0 %v626
    %722 = vmatmul.mubr.bf16.gmra.mxu0 %v307
    %v723 = vpop.f32.mrf.mxu0
    %v724 = vadd.f32 %v673, %v723
    %v725 = vpop.f32.mrf.mxu0
    %v726 = vadd.f32 %v675, %v725
    %v727 = vpop.f32.mrf.mxu0
    %v728 = vpop.f32.mrf.mxu0
    %729 = vdwg.mxu0
    %vm730 = vcmask 588800
    %v731 = vsel %vm730, %v716, 0.0
    %v732 = vadd.f32 %v714, %v731
    %733 = vadd.xlane.f32.xlu0 %v732
    %v734 = vpop.xlane.xlu0 %733
    %v735 = vsel %vm730, %v720, 0.0
    %v736 = vadd.f32 %v718, %v735
    %737 = vadd.xlane.f32.xlu0 %v736
    %v738 = vpop.xlane.xlu0 %737
    %v739 = vsel %vm730, %v726, 0.0
    %v740 = vadd.f32 %v724, %v739
    %741 = vadd.xlane.f32.xlu0 %v740
    %v742 = vpop.xlane.xlu0 %741
    %v743 = vrcp.pop 200.0
    %v744 = vmul.f32 %v734, %v743
    %v745 = vmul.f32 %v738, %v743
    %v746 = vmul.f32 %v742, %v743
    %v747 = vsub.f32 %v714, %v744
    %v748 = vsub.f32 %v716, %v744
    %v749 = vsub.f32 %v718, %v745
    %v750 = vsub.f32 %v720, %v745
    %v751 = vsub.f32 %v724, %v746
    %v752 = vsub.f32 %v726, %v746
    %v753 = vmul.f32 %v747, %v747
    %v754 = vmul.f32 %v748, %v748
    %v755 = vmul.f32 %v749, %v749
    %v756 = vmul.f32 %v750, %v750
    %v757 = vmul.f32 %v751, %v751
    %v758 = vmul.f32 %v752, %v752
    %v759 = vsel %vm730, %v754, 0.0
    %v760 = vadd.f32 %v753, %v759
    %761 = vadd.xlane.f32.xlu0 %v760
    %v762 = vpop.xlane.xlu0 %761
    %v763 = vsel %vm730, %v756, 0.0
    %v764 = vadd.f32 %v755, %v763
    %765 = vadd.xlane.f32.xlu0 %v764
    %v766 = vpop.xlane.xlu0 %765
    %v767 = vsel %vm730, %v758, 0.0
    %v768 = vadd.f32 %v757, %v767
    %769 = vadd.xlane.f32.xlu0 %v768
    %v770 = vpop.xlane.xlu0 %769
    %v771 = vmul.f32 %v762, %v743
    %v772 = vmul.f32 %v766, %v743
    %v773 = vmul.f32 %v770, %v743
    %v774 = vadd.f32 %v771, 1e-05
    %v775 = vadd.f32 %v772, 1e-05
    %v776 = vadd.f32 %v773, 1e-05
    %v777 = vrsqrt.pop %v774
    %v778 = vrsqrt.pop %v775
    %v779 = vrsqrt.pop %v776
    %v780 = vmul.f32 %v747, %v777
    %v781 = vmul.f32 %v748, %v777
    %v782 = vmul.f32 %v749, %v778
    %v783 = vmul.f32 %v750, %v778
    %v784 = vmul.f32 %v751, %v779
    %v785 = vmul.f32 %v752, %v779
    %v786 = vld [vmem:[%s5] sm:$0x3]
    %v788 = vlaneseq
    %v789 = vshrl.u32 %v788, 7
    %v790 = vsub.s32 0, %v789
    %v791 = vrot.slane %v786, %v790
    %v792 = vlaneseq
    %v793 = vshrl.u32 %v792, 7
    %v794 = vsub.s32 1, %v793
    %v795 = vrot.slane %v786, %v794
    %v798 = vmul.f32 %v780, %v791
    %v799 = vmul.f32 %v781, %v795
    %v800 = vmul.f32 %v782, %v791
    %v801 = vmul.f32 %v783, %v795
    %v802 = vmul.f32 %v784, %v791
    %v803 = vmul.f32 %v785, %v795
    %v804 = vld [vmem:[%s6] sm:$0x3]
    %v806 = vlaneseq
    %v807 = vshrl.u32 %v806, 7
    %v808 = vsub.s32 0, %v807
    %v809 = vrot.slane %v804, %v808
    %v810 = vlaneseq
    %v811 = vshrl.u32 %v810, 7
    %v812 = vsub.s32 1, %v811
    %v813 = vrot.slane %v804, %v812
    %v816 = vadd.f32 %v798, %v809
    %v817 = vadd.f32 %v799, %v813
    %v818 = vadd.f32 %v800, %v809
    %v819 = vadd.f32 %v801, %v813
    %v820 = vadd.f32 %v802, %v809
    %v821 = vadd.f32 %v803, %v813
    %822 = vst [vmem:[#allocation8] sm:$0xff] %v816
    %823 = vst.msk [vmem:[#allocation8 + $0x8] sm:$0xff] %vm730, %v817
    %824 = vst [vmem:[#allocation8 + $0x10] sm:$0xff] %v818
    %825 = vst.msk [vmem:[#allocation8 + $0x18] sm:$0xff] %vm730, %v819
    %826 = vst [vmem:[#allocation8 + $0x20] sm:$0xff] %v820
    %827 = vst.msk [vmem:[#allocation8 + $0x28] sm:$0xff] %vm730, %v821
    // Predicated region
    $region42: #{mlp_forward.1} parent=1 // pred_check
      _
    $region43: #{mlp_forward.1} parent=1 // pred_check_branch
      %829 = sbr.rel (0) target = $region45
    $region44: #{mlp_forward.1} parent=1 // pred_region
      %s831 = ssub.s32 768, 768
      %832 = vsyncadd [#allocation4], %s831
      %s833 = sshll.u32 [#allocation8], 4
      %s834 = int_to_ptr.vmem [resolvable:$true] %s833
      %839 = dma.vmem_to_hbm [thread:$0]  %s834, 768, %s7, [#allocation4], 256, 256, 16
    $region45: #{mlp_forward.1} parent=1 // pred_fallthru
      _
    // Predicated region
    $region46: #{mlp_forward.1} parent=1 // pred_check
      _
    $region47: #{mlp_forward.1} parent=1 // pred_check_branch
      %841 = sbr.rel (0) target = $region49
    $region48: #{mlp_forward.1} parent=1 // pred_region
      %842 = dma.done [#allocation4], 768
    $region49: #{mlp_forward.1} parent=1 // pred_fallthru
      _
    %843 = vsyncpa [#allocation3], 1
    %844 = vsyncpa [#allocation6], 1
    %845 = vsyncpa [#allocation4], 1

</llo_original>
